<compile_context>
chip_gen: v6e
topology: v6e:2x2x1
jax: 0.10.0
libtpu: 0.0.40
codegen_flags: <defaults>
</compile_context>

<pallas_src>
import jax
import jax.numpy as jnp
from jax.experimental import pallas as pl
from jax.experimental.pallas import tpu as pltpu


# ----------------------------------------------------------------- kernels --

def _sqdiff_kernel(x_ref, y_ref, o_ref):
    # elementwise (x - y)^2 on a lane-dense tile  (1-D branch of dist)
    d = x_ref[...] - y_ref[...]
    o_ref[...] = d * d


def _dist_rows_kernel(x_ref, y_ref, o_ref):
    # per-row squared distance: sum_k (x - y)^2  -> [tile_n, 1]
    # jnp.sum keeps the reduce on the VPU/XLU: this kernel is HBM-bound so that
    # slot has ample slack, and it avoids an MXU matmul with a 1-wide output.
    d = x_ref[...] - y_ref[...]
    o_ref[...] = jnp.sum(d * d, axis=-1, keepdims=True)


def _dist_packed_kernel(x_ref, y_ref, s_ref, o_ref):
    # x/y tiles are [tile_r, 128] f32 with p = 128 // D original rows packed per
    # 128-lane row.  The segmented lane reduction is a matmul against a
    # [128, p] one-hot segment matrix (MXU is idle in this DMA-bound kernel).
    d = x_ref[...] - y_ref[...]
    o_ref[...] = jnp.dot(d * d, s_ref[...], preferred_element_type=jnp.float32)


# ----------------------------------------------------------------- helpers --

def _row_tile(num_rows, hbm_bytes_per_row, vmem_bytes_per_row, *,
              target_bytes=4 << 20, vmem_block_cap=6 << 20,
              max_rows=32768, min_grid=8):
    """Row-tile choice.

    Target ~4 MiB of *real* HBM traffic per input block (amortizes the ~0.35us
    per-step overhead to ~10% even at v7x's 3.2 TB/s), capped so the
    lane-padded VMEM block stays <= ~6 MiB (2 inputs x 2 pipeline buffers
    ~ 24 MiB + output, inside the scoped limit we request on every chip).
    Multiple of 8, or the full extent for small inputs.
    """
    t = min(max_rows,
            max(8, target_bytes // max(hbm_bytes_per_row, 1)),
            max(8, vmem_block_cap // max(vmem_bytes_per_row, 1)))
    # When there is enough data to matter, keep >= min_grid steps so the
    # "parallel" grid axis can shard across v7x's two TensorCores and the
    # input/output DMA pipeline has steps to overlap.
    if num_rows * hbm_bytes_per_row >= min_grid * (1 << 20):
        t = min(t, pl.cdiv(num_rows, min_grid))
    t = max(8, (t // 8) * 8)
    return num_rows if num_rows <= t else t


def _clamp_tile(tile_rows, num_rows, auto_tile):
    """Respect a user tile but keep it a multiple of 8 (the (8,128) constraint)."""
    if tile_rows is None:
        return auto_tile
    t = int(tile_rows)
    if t >= num_rows or num_rows <= 8:
        return num_rows          # single full-extent block is always legal
    return max(8, (t // 8) * 8)


def _compiler_params(*block_vmem_bytes):
    """Parallel grid + explicit scoped-VMEM request for the chosen blocks.

    Every block is assumed double-buffered; +4 MiB headroom for compiler
    scratch.  Raises past v5e's 16 MiB default, stays <= 64 MiB (v7x physical).
    """
    need = 2 * sum(block_vmem_bytes) + (4 << 20)
    return pltpu.CompilerParams(
        dimension_semantics=("parallel",),
        vmem_limit_bytes=int(min(64 << 20, max(32 << 20, need))))


# ------------------------------------------------------------------- paths --

def _dist_packed(xf, yf, n, d, tile_rows):
    p = 128 // d                 # original rows packed per 128-lane row
    r = n // p                   # packed rows
    xp = xf.reshape(r, 128)      # free: contiguous row-major reinterpretation
    yp = yf.reshape(r, 128)

    # one-hot segment matrix: lane l belongs to packed slot l // d
    lane = jax.lax.broadcasted_iota(jnp.int32, (128, p), 0)
    col = jax.lax.broadcasted_iota(jnp.int32, (128, p), 1)
    smat = (lane // d == col).astype(jnp.float32)

    tile_r = _clamp_tile(tile_rows, r, _row_tile(r, 128 * 4, 128 * 4))
    grid = pl.cdiv(r, tile_r)
    blk = tile_r * 128 * 4

    out = pl.pallas_call(
        _dist_packed_kernel,
        out_shape=jax.ShapeDtypeStruct((r, p), jnp.float32),
        grid_spec=pltpu.PrefetchScalarGridSpec(
            num_scalar_prefetch=0,
            grid=(grid,),
            in_specs=[pl.BlockSpec((tile_r, 128), lambda i: (i, 0)),
                      pl.BlockSpec((tile_r, 128), lambda i: (i, 0)),
                      pl.BlockSpec((128, p), lambda i: (0, 0))],
            out_specs=pl.BlockSpec((tile_r, p), lambda i: (i, 0)),
        ),
        compiler_params=_compiler_params(blk, blk, 128 * 128 * 4,
                                         tile_r * 128 * 4),
        cost_estimate=pl.CostEstimate(
            flops=3 * n * d, transcendentals=0,
            bytes_accessed=2 * n * d * 4 + n * 4),
    )(xp, yp, smat)
    return out.reshape(n)        # (r, p) row-major == original row order


def _dist_general(xf, yf, n, d, tile_rows):
    lanes = ((d + 127) // 128) * 128      # VMEM lane-padded row width
    # Tile by REAL HBM bytes per row (d*4); bound VMEM by the padded width.
    tile_n = _clamp_tile(tile_rows, n, _row_tile(n, d * 4, lanes * 4))
    grid = pl.cdiv(n, tile_n)
    blk_vmem = tile_n * lanes * 4

    out = pl.pallas_call(
        _dist_rows_kernel,
        out_shape=jax.ShapeDtypeStruct((n, 1), jnp.float32),
        grid_spec=pltpu.PrefetchScalarGridSpec(
            num_scalar_prefetch=0,
            grid=(grid,),
            in_specs=[pl.BlockSpec((tile_n, d), lambda i: (i, 0)),
                      pl.BlockSpec((tile_n, d), lambda i: (i, 0))],
            out_specs=pl.BlockSpec((tile_n, 1), lambda i: (i, 0)),
        ),
        compiler_params=_compiler_params(blk_vmem, blk_vmem, tile_n * 128 * 4),
        cost_estimate=pl.CostEstimate(
            flops=3 * n * d, transcendentals=0,
            bytes_accessed=2 * n * d * 4 + n * 4),
    )(xf, yf)
    return out.reshape(n)


def _dist_1d(x, y, tile_rows):
    n = x.shape[0]
    # Lane-align: pad to a multiple of 128 so even large unaligned n go through
    # the tiled, pipelined path instead of one full-array VMEM block.
    n_pad = ((n + 127) // 128) * 128
    if n_pad != n:
        x = jnp.pad(x, (0, n_pad - n))
        y = jnp.pad(y, (0, n_pad - n))
    r = n_pad // 128
    tile_r = _clamp_tile(tile_rows, r, _row_tile(r, 128 * 4, 128 * 4))
    grid = pl.cdiv(r, tile_r)
    blk = tile_r * 128 * 4

    out = pl.pallas_call(
        _sqdiff_kernel,
        out_shape=jax.ShapeDtypeStruct((r, 128), jnp.float32),
        grid_spec=pltpu.PrefetchScalarGridSpec(
            num_scalar_prefetch=0,
            grid=(grid,),
            in_specs=[pl.BlockSpec((tile_r, 128), lambda i: (i, 0)),
                      pl.BlockSpec((tile_r, 128), lambda i: (i, 0))],
            out_specs=pl.BlockSpec((tile_r, 128), lambda i: (i, 0)),
        ),
        compiler_params=_compiler_params(blk, blk, blk),
        cost_estimate=pl.CostEstimate(
            flops=2 * n, transcendentals=0, bytes_accessed=3 * n * 4),
    )(x.reshape(r, 128), y.reshape(r, 128))
    out = out.reshape(n_pad)
    return out[:n] if n_pad != n else out


# ------------------------------------------------------------------ public --

def dist(x, y, *, tile_rows=None):
    """Pallas equivalent of BaseModel.dist."""
    x = jnp.asarray(x, jnp.float32)
    y = jnp.asarray(y, jnp.float32)

    if x.ndim == 1:
        return _dist_1d(x, y, tile_rows)

    lead = x.shape[:-1]
    d = x.shape[-1]
    xf = x.reshape(-1, d)
    yf = y.reshape(-1, d)
    n = xf.shape[0]
    if n == 0 or d == 0:
        return jnp.zeros(lead, jnp.float32)

    if d <= 128 and 128 % d == 0 and n % (128 // d) == 0:
        out = _dist_packed(xf, yf, n, d, tile_rows)   # lane-packed fast path
    else:
        out = _dist_general(xf, yf, n, d, tile_rows)  # general fallback
    return out.reshape(lead)


def dist_reference(x, y):
    x = jnp.asarray(x, jnp.float32)
    y = jnp.asarray(y, jnp.float32)
    if x.ndim > 1:
        return jnp.sum((x - y) ** 2, axis=-1)
    return (x - y) ** 2


if __name__ == "__main__":
    key = jax.random.PRNGKey(0)
    ks = jax.random.split(key, 8)

    # batch=2 "poses", 16 points, hidden=32  -> lane-packed path (4 rows/vreg)
    x = jax.random.normal(ks[0], (2, 16, 32), jnp.float32)
    y = jax.random.normal(ks[1], (2, 16, 32), jnp.float32)
    out = jax.block_until_ready(dist(x, y))
    ref = dist_reference(x, y)
    assert out.shape == ref.shape
    assert jnp.allclose(out, ref, atol=1e-5, rtol=1e-5)

    # general path (D does not divide 128) with a forced small row tile so the
    # last grid block is partial -> exercises masked OOB handling, no host pad
    xg = jax.random.normal(ks[2], (3, 7, 20), jnp.float32)
    yg = jax.random.normal(ks[3], (3, 7, 20), jnp.float32)
    outg = jax.block_until_ready(dist(xg, yg, tile_rows=8))
    refg = dist_reference(xg, yg)
    assert outg.shape == refg.shape
    assert jnp.allclose(outg, refg, atol=1e-5, rtol=1e-5)

    # 1-D branch of BaseModel.dist (lane-aligned)
    x1 = jax.random.normal(ks[4], (128,), jnp.float32)
    y1 = jax.random.normal(ks[5], (128,), jnp.float32)
    out1 = jax.block_until_ready(dist(x1, y1))
    ref1 = dist_reference(x1, y1)
    assert out1.shape == ref1.shape
    assert jnp.allclose(out1, ref1, atol=1e-5, rtol=1e-5)

    # 1-D branch, unaligned length -> exercises the lane-pad path
    x2 = jax.random.normal(ks[6], (50,), jnp.float32)
    y2 = jax.random.normal(ks[7], (50,), jnp.float32)
    out2 = jax.block_until_ready(dist(x2, y2))
    ref2 = dist_reference(x2, y2)
    assert out2.shape == ref2.shape
    assert jnp.allclose(out2, ref2, atol=1e-5, rtol=1e-5)

    print("KERNEL_OK")
</pallas_src>

<mosaic_0001>
module attributes {stable_mosaic.version = 11 : i64} {
  func.func @_dist_packed_kernel(%arg0: i32, %arg1: memref<8x128xf32, #tpu.memory_space<vmem>>, %arg2: memref<8x128xf32, #tpu.memory_space<vmem>>, %arg3: memref<128x4xf32, #tpu.memory_space<vmem>>, %arg4: memref<8x4xf32, #tpu.memory_space<vmem>>) attributes {dimension_semantics = [#tpu.dimension_semantics<parallel>], iteration_bounds = array<i64: 1>, scalar_prefetch = 0 : i64, scratch_operands = 0 : i64, tpu.core_type = #tpu.core_type<tc>, window_params = [{transform_indices = @transform_0, window_bounds = array<i64: 8, 128>}, {transform_indices = @transform_1, window_bounds = array<i64: 8, 128>}, {pipeline_mode = #tpu.pipeline_mode<synchronous>, transform_indices = @transform_2, window_bounds = array<i64: 128, 4>}, {transform_indices = @transform_3, window_bounds = array<i64: 8, 4>}]} {
    %c0 = arith.constant 0 : index
    %c0_0 = arith.constant 0 : index
    %0 = vector.load %arg1[%c0, %c0_0] : memref<8x128xf32, #tpu.memory_space<vmem>>, vector<8x128xf32>
    %c0_1 = arith.constant 0 : index
    %c0_2 = arith.constant 0 : index
    %1 = vector.load %arg2[%c0_1, %c0_2] : memref<8x128xf32, #tpu.memory_space<vmem>>, vector<8x128xf32>
    %2 = arith.subf %0, %1 : vector<8x128xf32>
    %3 = arith.mulf %2, %2 : vector<8x128xf32>
    %c0_3 = arith.constant 0 : index
    %c0_4 = arith.constant 0 : index
    %4 = vector.load %arg3[%c0_3, %c0_4] : memref<128x4xf32, #tpu.memory_space<vmem>>, vector<128x4xf32>
    %cst = arith.constant dense<0.000000e+00> : vector<8x4xf32>
    %5 = tpu.matmul %3, %4, %cst {dimension_numbers = #tpu.dot_dimension_numbers<[1], [0], [0], [1], [0, 0, 1, 1], [], []>} : vector<8x128xf32>, vector<128x4xf32>, vector<8x4xf32> -> vector<8x4xf32>
    %c0_5 = arith.constant 0 : index
    %c0_6 = arith.constant 0 : index
    %6 = vector.load %arg4[%c0_5, %c0_6] : memref<8x4xf32, #tpu.memory_space<vmem>>, vector<8x4xf32>
    tpu.vector_store %arg4[%c0_5, %c0_6], %5 {strides = array<i32>} : memref<8x4xf32, #tpu.memory_space<vmem>>, vector<8x4xf32>,
    return
  }
  func.func @transform_0(%arg0: i32) -> (i32, i32) {
    %c0_i32 = arith.constant 0 : i32
    %c0_i32_0 = arith.constant 0 : i32
    return %arg0, %c0_i32 : i32, i32
  }
  func.func @transform_1(%arg0: i32) -> (i32, i32) {
    %c0_i32 = arith.constant 0 : i32
    %c0_i32_0 = arith.constant 0 : i32
    return %arg0, %c0_i32 : i32, i32
  }
  func.func @transform_2(%arg0: i32) -> (i32, i32) {
    %c0_i32 = arith.constant 0 : i32
    %c0_i32_0 = arith.constant 0 : i32
    %c0_i32_1 = arith.constant 0 : i32
    return %c0_i32, %c0_i32_0 : i32, i32
  }
  func.func @transform_3(%arg0: i32) -> (i32, i32) {
    %c0_i32 = arith.constant 0 : i32
    %c0_i32_0 = arith.constant 0 : i32
    return %arg0, %c0_i32 : i32, i32
  }
}

</mosaic_0001>

<llo_original>
// kernel: tpu_custom_call.1
$region0: #{tpu_custom_call.1}
  #allocation0 [shape = 'u32[]', space=smem, size = 0x4, offset = 0x4, fixed_abs, tag = 'smem constant byte address 0x4 - core index']
  #allocation1 [shape = 'u32[144,128]{1,0:T(1,128)}', space=vmem, size = 0x12000, scoped, tag = 'internal scratch']
  %s0 = inlined_call_operand.vmem [shape: f32[8,128], index: 0, kind: input, shape index: {}]
  %s1 = inlined_call_operand.vmem [shape: f32[8,128], index: 1, kind: input, shape index: {}]
  %s2 = inlined_call_operand.vmem [shape: f32[128,4], index: 2, kind: input, shape index: {}]
  %s3 = inlined_call_operand.vmem [shape: f32[8,4], index: 3, kind: output, shape index: {}]
  %s4 = sld [smem:[#allocation0]]
  $region22: #{tpu_custom_call.1} parent=0
    _
  %s6 = ssub.s32 1, %s4
  %s7 = scalar_select 0, %s6, %s4
  // Predicated region
  $region2: #{tpu_custom_call.1} parent=0 // pred_check
    _
  $region3: #{tpu_custom_call.1} parent=0 // pred_check_branch
    %9 = sbr.rel (0) target = $region5
  $region4: #{tpu_custom_call.1} parent=0 // pred_region
    _
  $region5: #{tpu_custom_call.1} parent=0 // pred_fallthru
    _
  // Predicated region
  $region6: #{tpu_custom_call.1} parent=0 // pred_check
    _
  $region7: #{tpu_custom_call.1} parent=0 // pred_check_branch
    %11 = sbr.rel (0) target = $region9
  $region8: #{tpu_custom_call.1} parent=0 // pred_region
    _
  $region9: #{tpu_custom_call.1} parent=0 // pred_fallthru
    _
  // Predicated region
  $region10: #{tpu_custom_call.1} parent=0 // pred_check
    _
  $region11: #{tpu_custom_call.1} parent=0 // pred_check_branch
    %13 = sbr.rel (0) target = $region13
  $region12: #{tpu_custom_call.1} parent=0 // pred_region
    _
  $region13: #{tpu_custom_call.1} parent=0 // pred_fallthru
    _
  %v14 = vld [vmem:[%s0] sm:$0xff]
  %v15 = vld [vmem:[%s1] sm:$0xff]
  %v16 = vsub.f32 %v14, %v15
  %v17 = vmul.f32 %v16, %v16
  %v18 = vld [vmem:[%s2] sm:$0xff]
  %v19 = vld [vmem:[%s2 + $0x8] sm:$0xff]
  %v20 = vld [vmem:[%s2 + $0x10] sm:$0xff]
  %v21 = vld [vmem:[%s2 + $0x18] sm:$0xff]
  %v22 = vld [vmem:[%s2 + $0x20] sm:$0xff]
  %v23 = vld [vmem:[%s2 + $0x28] sm:$0xff]
  %v24 = vld [vmem:[%s2 + $0x30] sm:$0xff]
  %v25 = vld [vmem:[%s2 + $0x38] sm:$0xff]
  %v26 = vld [vmem:[%s2 + $0x40] sm:$0xff]
  %v27 = vld [vmem:[%s2 + $0x48] sm:$0xff]
  %v28 = vld [vmem:[%s2 + $0x50] sm:$0xff]
  %v29 = vld [vmem:[%s2 + $0x58] sm:$0xff]
  %v30 = vld [vmem:[%s2 + $0x60] sm:$0xff]
  %v31 = vld [vmem:[%s2 + $0x68] sm:$0xff]
  %v32 = vld [vmem:[%s2 + $0x70] sm:$0xff]
  %v33 = vld [vmem:[%s2 + $0x78] sm:$0xff]
  %34 = vmatprep.subr.mxu0 0.0
  %35 = vmatpush1.msra.mxu0 %v33
  %36 = vmatprep.subr.mxu0 0.0
  %37 = vmatpush1.msra.mxu0 %v32
  %38 = vmatprep.subr.mxu0 0.0
  %39 = vmatpush1.msra.mxu0 %v31
  %40 = vmatprep.subr.mxu0 0.0
  %41 = vmatpush1.msra.mxu0 %v30
  %42 = vmatprep.subr.mxu0 0.0
  %43 = vmatpush1.msra.mxu0 %v29
  %44 = vmatprep.subr.mxu0 0.0
  %45 = vmatpush1.msra.mxu0 %v28
  %46 = vmatprep.subr.mxu0 0.0
  %47 = vmatpush1.msra.mxu0 %v27
  %48 = vmatprep.subr.mxu0 0.0
  %49 = vmatpush1.msra.mxu0 %v26
  %50 = vmatprep.subr.mxu0 0.0
  %51 = vmatpush1.msra.mxu0 %v25
  %52 = vmatprep.subr.mxu0 0.0
  %53 = vmatpush1.msra.mxu0 %v24
  %54 = vmatprep.subr.mxu0 0.0
  %55 = vmatpush1.msra.mxu0 %v23
  %56 = vmatprep.subr.mxu0 0.0
  %57 = vmatpush1.msra.mxu0 %v22
  %58 = vmatprep.subr.mxu0 0.0
  %59 = vmatpush1.msra.mxu0 %v21
  %60 = vmatprep.subr.mxu0 0.0
  %61 = vmatpush1.msra.mxu0 %v20
  %62 = vmatprep.subr.mxu0 0.0
  %63 = vmatpush1.msra.mxu0 %v19
  %64 = vmatprep.subr.mxu0 0.0
  %65 = vmatpush1.msra.mxu0 %v18
  %66 = vmatprep.subr.mxu0 0.0
  %67 = vmatpush2.msra.mxu0 0.0
  %68 = vmatprep.subr.mxu0 0.0
  %69 = vmatpush2.msra.mxu0 0.0
  %70 = vmatprep.subr.mxu0 0.0
  %71 = vmatpush2.msra.mxu0 0.0
  %72 = vmatprep.subr.mxu0 0.0
  %73 = vmatpush2.msra.mxu0 0.0
  %74 = vmatprep.subr.mxu0 0.0
  %75 = vmatpush2.msra.mxu0 0.0
  %76 = vmatprep.subr.mxu0 0.0
  %77 = vmatpush2.msra.mxu0 0.0
  %78 = vmatprep.subr.mxu0 0.0
  %79 = vmatpush2.msra.mxu0 0.0
  %80 = vmatprep.subr.mxu0 0.0
  %81 = vmatpush2.msra.mxu0 0.0
  %82 = vmatprep.subr.mxu0 0.0
  %83 = vmatpush2.msra.mxu0 0.0
  %84 = vmatprep.subr.mxu0 0.0
  %85 = vmatpush2.msra.mxu0 0.0
  %86 = vmatprep.subr.mxu0 0.0
  %87 = vmatpush2.msra.mxu0 0.0
  %88 = vmatprep.subr.mxu0 0.0
  %89 = vmatpush2.msra.mxu0 0.0
  %90 = vmatprep.subr.mxu0 0.0
  %91 = vmatpush2.msra.mxu0 0.0
  %92 = vmatprep.subr.mxu0 0.0
  %93 = vmatpush2.msra.mxu0 0.0
  %94 = vmatprep.subr.mxu0 0.0
  %95 = vmatpush2.msra.mxu0 0.0
  %96 = vmatprep.subr.mxu0 0.0
  %97 = vmatpush2.msra.mxu0 0.0
  %98 = vmatprep.mubr.f32.mxu0 0.0
  %99 = vmatmul.mubr.f32.gmra.mxu0 %v17
  %v100 = vpop.f32.mrf.mxu0
  %v101 = vadd.f32 0.0, %v100
  %v102 = vpop.f32.mrf.mxu0
  %103 = vdwg.mxu0
  %vm104 = vcmask 31744
  %105 = vst.msk [vmem:[%s3] sm:$0xff] %vm104, %v101
  // Predicated region
  $region14: #{tpu_custom_call.1} parent=0 // pred_check
    _
  $region15: #{tpu_custom_call.1} parent=0 // pred_check_branch
    %107 = sbr.rel (0) target = $region17
  $region16: #{tpu_custom_call.1} parent=0 // pred_region
    _
  $region17: #{tpu_custom_call.1} parent=0 // pred_fallthru
    _
  // Predicated region
  $region18: #{tpu_custom_call.1} parent=0 // pred_check
    _
  $region19: #{tpu_custom_call.1} parent=0 // pred_check_branch
    %109 = sbr.rel (0) target = $region21
  $region20: #{tpu_custom_call.1} parent=0 // pred_region
    _
  $region21: #{tpu_custom_call.1} parent=0 // pred_fallthru
    _

</llo_original>
